<compile_context>
chip_gen: v7x
topology: tpu7x:2x2x1
jax: 0.10.0
libtpu: 0.0.40
codegen_flags: <defaults>
</compile_context>

<pallas_src>
import functools
import math

import jax
import jax.numpy as jnp
from jax.experimental import pallas as pl
from jax.experimental.pallas import tpu as pltpu

LN_EPS = 1e-12


# ------------------------------ kernel ---------------------------------------
def _layernorm_kernel(x_ref, g_ref, b_ref, o_ref, *, eps):
    x = x_ref[...].astype(jnp.float32)
    g = g_ref[...].astype(jnp.float32)          # (1, H) -> broadcast over rows
    b = b_ref[...].astype(jnp.float32)

    # one-pass stats: population (unbiased=False) variance = E[x^2] - E[x]^2
    mean = jnp.mean(x, axis=-1, keepdims=True)
    mean_sq = jnp.mean(x * x, axis=-1, keepdims=True)
    var = mean_sq - mean * mean
    inv = jax.lax.rsqrt(var + eps)               # EUP

    o_ref[...] = ((x - mean) * inv * g + b).astype(o_ref.dtype)


# ------------------------------ wrapper ---------------------------------------
def layernorm(x, gamma, beta, *, eps=LN_EPS):
    """LayerNorm over the last axis with PyTorch semantics."""
    *lead, H = x.shape
    M = math.prod(lead) if lead else 1
    x2 = x.reshape(M, H)
    g = gamma.reshape(1, H)
    b = beta.reshape(1, H)

    # Pick the largest power-of-two row tile that divides M, is a multiple of 8
    # (sublane constraint) and keeps in+out double buffers within ~8 MiB VMEM.
    if M % 8 == 0:
        bytes_per_row = 4 * H
        vmem_rows = max(8, (8 * 1024 * 1024) // (4 * bytes_per_row))  # 2 in + 2 out bufs
        tm = 8
        cand = 8
        while cand <= min(M, vmem_rows):
            if M % cand == 0:
                tm = cand
            cand *= 2
    else:
        tm = M  # full-extent block (allowed even when not a multiple of 8)

    grid = (M // tm,)

    out = pl.pallas_call(
        functools.partial(_layernorm_kernel, eps=eps),
        grid=grid,
        in_specs=[
            pl.BlockSpec((tm, H), lambda i: (i, 0)),
            pl.BlockSpec((1, H), lambda i: (0, 0)),
            pl.BlockSpec((1, H), lambda i: (0, 0)),
        ],
        out_specs=pl.BlockSpec((tm, H), lambda i: (i, 0)),
        out_shape=jax.ShapeDtypeStruct((M, H), x.dtype),
        compiler_params=pltpu.CompilerParams(dimension_semantics=("parallel",)),
    )(x2, g, b)

    return out.reshape(x.shape)


# ------------------------------ reference -------------------------------------
def _layernorm_ref(x, gamma, beta, eps=LN_EPS):
    x32 = x.astype(jnp.float32)
    mean = x32.mean(-1, keepdims=True)
    var = ((x32 - mean) ** 2).mean(-1, keepdims=True)   # unbiased=False
    out = (x32 - mean) / jnp.sqrt(var + eps)
    return (gamma * out + beta).astype(x.dtype)


# -------------------------------- main -----------------------------------------
if __name__ == "__main__":
    key = jax.random.PRNGKey(0)
    k1, k2, k3, k4 = jax.random.split(key, 4)

    # module-consistent small shapes: batch=2, seq=8, hidden=32
    B, S, H = 2, 8, 32
    x = jax.random.normal(k1, (B, S, H), jnp.float32)
    gamma = 1.0 + 0.1 * jax.random.normal(k2, (H,), jnp.float32)
    beta = 0.1 * jax.random.normal(k3, (H,), jnp.float32)

    fwd = jax.jit(layernorm)
    out = jax.block_until_ready(fwd(x, gamma, beta))
    ref = _layernorm_ref(x, gamma, beta)
    assert out.shape == x.shape and out.dtype == x.dtype
    assert bool(jnp.allclose(out, ref, atol=1e-5, rtol=1e-5)), "3D case mismatch"

    # extra check: row count not a multiple of 8 (falls back to full-extent block)
    x_odd = jax.random.normal(k4, (3, 5, H), jnp.float32)
    out_odd = jax.block_until_ready(layernorm(x_odd, gamma, beta))
    assert bool(jnp.allclose(out_odd, _layernorm_ref(x_odd, gamma, beta),
                             atol=1e-5, rtol=1e-5)), "odd-row case mismatch"

    assert bool(jnp.all(jnp.isfinite(out)))
    print("KERNEL_OK")
</pallas_src>

<mosaic_0001>
module attributes {stable_mosaic.version = 11 : i64} {
  func.func @_layernorm_kernel(%arg0: i32, %arg1: memref<16x32xf32, #tpu.memory_space<vmem>>, %arg2: memref<1x32xf32, #tpu.memory_space<vmem>>, %arg3: memref<1x32xf32, #tpu.memory_space<vmem>>, %arg4: memref<16x32xf32, #tpu.memory_space<vmem>>) attributes {dimension_semantics = [#tpu.dimension_semantics<parallel>], iteration_bounds = array<i64: 1>, scalar_prefetch = 0 : i64, scratch_operands = 0 : i64, tpu.core_type = #tpu.core_type<tc>, window_params = [{transform_indices = @transform_0, window_bounds = array<i64: 16, 32>}, {pipeline_mode = #tpu.pipeline_mode<synchronous>, transform_indices = @transform_1, window_bounds = array<i64: 1, 32>}, {pipeline_mode = #tpu.pipeline_mode<synchronous>, transform_indices = @transform_2, window_bounds = array<i64: 1, 32>}, {transform_indices = @transform_3, window_bounds = array<i64: 16, 32>}]} {
    %c0 = arith.constant 0 : index
    %c0_0 = arith.constant 0 : index
    %0 = vector.load %arg1[%c0, %c0_0] : memref<16x32xf32, #tpu.memory_space<vmem>>, vector<16x32xf32>
    %c0_1 = arith.constant 0 : index
    %c0_2 = arith.constant 0 : index
    %1 = vector.load %arg2[%c0_1, %c0_2] : memref<1x32xf32, #tpu.memory_space<vmem>>, vector<1x32xf32>
    %c0_3 = arith.constant 0 : index
    %c0_4 = arith.constant 0 : index
    %2 = vector.load %arg3[%c0_3, %c0_4] : memref<1x32xf32, #tpu.memory_space<vmem>>, vector<1x32xf32>
    %cst = arith.constant dense<0.000000e+00> : vector<16xf32>
    %3 = vector.multi_reduction <add>, %0, %cst [1] : vector<16x32xf32> to vector<16xf32>
    %4 = vector.shape_cast %3 : vector<16xf32> to vector<16x1xf32>
    %cst_5 = arith.constant 3.200000e+01 : f32
    %5 = vector.broadcast %cst_5 : f32 to vector<16x1xf32>
    %6 = arith.divf %4, %5 : vector<16x1xf32>
    %7 = arith.mulf %0, %0 : vector<16x32xf32>
    %cst_6 = arith.constant dense<0.000000e+00> : vector<16xf32>
    %8 = vector.multi_reduction <add>, %7, %cst_6 [1] : vector<16x32xf32> to vector<16xf32>
    %9 = vector.shape_cast %8 : vector<16xf32> to vector<16x1xf32>
    %cst_7 = arith.constant 3.200000e+01 : f32
    %10 = vector.broadcast %cst_7 : f32 to vector<16x1xf32>
    %11 = arith.divf %9, %10 : vector<16x1xf32>
    %12 = arith.mulf %6, %6 : vector<16x1xf32>
    %13 = arith.subf %11, %12 : vector<16x1xf32>
    %cst_8 = arith.constant 9.99999996E-13 : f32
    %14 = vector.broadcast %cst_8 : f32 to vector<16x1xf32>
    %15 = arith.addf %13, %14 : vector<16x1xf32>
    %16 = math.rsqrt %15 : vector<16x1xf32>
    %17 = vector.broadcast %6 : vector<16x1xf32> to vector<16x32xf32>
    %18 = arith.subf %0, %17 : vector<16x32xf32>
    %19 = vector.broadcast %16 : vector<16x1xf32> to vector<16x32xf32>
    %20 = arith.mulf %18, %19 : vector<16x32xf32>
    %21 = vector.broadcast %1 : vector<1x32xf32> to vector<16x32xf32>
    %22 = arith.mulf %20, %21 : vector<16x32xf32>
    %23 = vector.broadcast %2 : vector<1x32xf32> to vector<16x32xf32>
    %24 = arith.addf %22, %23 : vector<16x32xf32>
    %c0_9 = arith.constant 0 : index
    %c0_10 = arith.constant 0 : index
    %25 = vector.load %arg4[%c0_9, %c0_10] : memref<16x32xf32, #tpu.memory_space<vmem>>, vector<16x32xf32>
    tpu.vector_store %arg4[%c0_9, %c0_10], %24 {strides = array<i32>} : memref<16x32xf32, #tpu.memory_space<vmem>>, vector<16x32xf32>,
    return
  }
  func.func @transform_0(%arg0: i32) -> (i32, i32) {
    %c0_i32 = arith.constant 0 : i32
    %c0_i32_0 = arith.constant 0 : i32
    return %arg0, %c0_i32 : i32, i32
  }
  func.func @transform_1(%arg0: i32) -> (i32, i32) {
    %c0_i32 = arith.constant 0 : i32
    %c0_i32_0 = arith.constant 0 : i32
    %c0_i32_1 = arith.constant 0 : i32
    return %c0_i32, %c0_i32_0 : i32, i32
  }
  func.func @transform_2(%arg0: i32) -> (i32, i32) {
    %c0_i32 = arith.constant 0 : i32
    %c0_i32_0 = arith.constant 0 : i32
    %c0_i32_1 = arith.constant 0 : i32
    return %c0_i32, %c0_i32_0 : i32, i32
  }
  func.func @transform_3(%arg0: i32) -> (i32, i32) {
    %c0_i32 = arith.constant 0 : i32
    %c0_i32_0 = arith.constant 0 : i32
    return %arg0, %c0_i32 : i32, i32
  }
}

</mosaic_0001>

<llo_original>
// kernel: layernorm.1
$region0: #{layernorm.1}
  #allocation0 [shape = 'u32[]', space=smem, size = 0x4, offset = 0x4, fixed_abs, tag = 'smem constant byte address 0x4 - core index']
  #allocation1 [shape = 'u32[144,128]{1,0:T(1,128)}', space=vmem, size = 0x12000, scoped, tag = 'internal scratch']
  %s0 = inlined_call_operand.hbm [shape: f32[16,32], index: 0, kind: input, shape index: {}]
  %s1 = inlined_call_operand.vmem [shape: f32[1,32], index: 1, kind: input, shape index: {}]
  %s2 = inlined_call_operand.vmem [shape: f32[1,32], index: 2, kind: input, shape index: {}]
  %s3 = inlined_call_operand.hbm [shape: f32[16,32], index: 3, kind: output, shape index: {}]
  %s4 = sld [smem:[#allocation0]]
  $region26: #{layernorm.1} parent=0
    _
  %s6 = ssub.s32 1, %s4
  %s7 = scalar_select 0, %s6, %s4
  $region1: #{layernorm.1} parent=0
    #allocation2 [shape = 'u8[8192]{0}', space=vmem, size = 0x2000, scoped, tag = 'input window, operand 0, single buffered']
    #allocation3 [shape = 's32[1]{0}', space=sflag, size = 0x4, scoped, tag = 'scoped memory for layernorm.1']
    #allocation4 [shape = 's32[1]{0}', space=sflag, size = 0x4, scoped, tag = 'scoped memory for layernorm.1']
    #allocation5 [shape = 'u8[8192]{0}', space=vmem, size = 0x2000, scoped, tag = 'output window, operand 0, single buffered']
    %8 = vsyncpa [#allocation3], 0
    %9 = vsyncpa [#allocation4], 0
    // Predicated region
    $region2: #{layernorm.1} parent=1 // pred_check
      _
    $region3: #{layernorm.1} parent=1 // pred_check_branch
      %11 = sbr.rel (0) target = $region5
    $region4: #{layernorm.1} parent=1 // pred_region
      %s13 = ssub.s32 256, 256
      %14 = vsyncadd [#allocation3], %s13
      %s15 = sshll.u32 [#allocation2], 4
      %s16 = int_to_ptr.vmem [resolvable:$true] %s15
      %21 = dma.hbm_to_vmem [thread:$0]  %s0, 256, %s16, [#allocation3], 128, 128, 8
    $region5: #{layernorm.1} parent=1 // pred_fallthru
      _
    // Predicated region
    $region6: #{layernorm.1} parent=1 // pred_check
      _
    $region7: #{layernorm.1} parent=1 // pred_check_branch
      %23 = sbr.rel (0) target = $region9
    $region8: #{layernorm.1} parent=1 // pred_region
      _
    $region9: #{layernorm.1} parent=1 // pred_fallthru
      _
    // Predicated region
    $region10: #{layernorm.1} parent=1 // pred_check
      _
    $region11: #{layernorm.1} parent=1 // pred_check_branch
      %25 = sbr.rel (0) target = $region13
    $region12: #{layernorm.1} parent=1 // pred_region
      _
    $region13: #{layernorm.1} parent=1 // pred_fallthru
      _
    // Predicated region
    $region14: #{layernorm.1} parent=1 // pred_check
      _
    $region15: #{layernorm.1} parent=1 // pred_check_branch
      %27 = sbr.rel (0) target = $region17
    $region16: #{layernorm.1} parent=1 // pred_region
      %28 = dma.done [#allocation3], 256
    $region17: #{layernorm.1} parent=1 // pred_fallthru
      _
    %v29 = vld [vmem:[#allocation2] sm:$0xff]
    %v30 = vld [vmem:[#allocation2 + $0x8] sm:$0xff]
    %v31 = vld [vmem:[%s1] sm:$0x1]
    %v32 = vld [vmem:[%s2] sm:$0x1]
    %vm33 = vcmask 261120
    %v34 = vsel %vm33, %v29, 0.0
    %35 = vadd.xlane.f32.xlu0 %v34
    %v36 = vpop.xlane.xlu0 %35
    %v37 = vsel %vm33, %v30, 0.0
    %38 = vadd.xlane.f32.xlu0 %v37
    %v39 = vpop.xlane.xlu0 %38
    %v40 = vrcp.pop 32.0
    %v41 = vmul.f32 %v36, %v40
    %v42 = vmul.f32 %v39, %v40
    %v43 = vmul.f32 %v29, %v29
    %v44 = vmul.f32 %v30, %v30
    %v45 = vsel %vm33, %v43, 0.0
    %46 = vadd.xlane.f32.xlu0 %v45
    %v47 = vpop.xlane.xlu0 %46
    %v48 = vsel %vm33, %v44, 0.0
    %49 = vadd.xlane.f32.xlu0 %v48
    %v50 = vpop.xlane.xlu0 %49
    %v51 = vmul.f32 %v47, %v40
    %v52 = vmul.f32 %v50, %v40
    %v53 = vmul.f32 %v41, %v41
    %v54 = vmul.f32 %v42, %v42
    %v55 = vsub.f32 %v51, %v53
    %v56 = vsub.f32 %v52, %v54
    %v57 = vadd.f32 %v55, 1e-12
    %v58 = vadd.f32 %v56, 1e-12
    %v59 = vrsqrt.pop %v57
    %v60 = vrsqrt.pop %v58
    %v61 = vsub.f32 %v29, %v41
    %v62 = vsub.f32 %v30, %v42
    %v63 = vmul.f32 %v61, %v59
    %v64 = vmul.f32 %v62, %v60
    %v66 = vlaneseq
    %v67 = vshrl.u32 %v66, 7
    %v68 = vsub.s32 0, %v67
    %v69 = vrot.slane %v31, %v68
    %v71 = vmul.f32 %v63, %v69
    %v72 = vmul.f32 %v64, %v69
    %v74 = vlaneseq
    %v75 = vshrl.u32 %v74, 7
    %v76 = vsub.s32 0, %v75
    %v77 = vrot.slane %v32, %v76
    %v79 = vadd.f32 %v71, %v77
    %v80 = vadd.f32 %v72, %v77
    %81 = vst.msk [vmem:[#allocation5] sm:$0xff] %vm33, %v79
    %82 = vst.msk [vmem:[#allocation5 + $0x8] sm:$0xff] %vm33, %v80
    // Predicated region
    $region18: #{layernorm.1} parent=1 // pred_check
      _
    $region19: #{layernorm.1} parent=1 // pred_check_branch
      %84 = sbr.rel (0) target = $region21
    $region20: #{layernorm.1} parent=1 // pred_region
      %s86 = ssub.s32 256, 256
      %87 = vsyncadd [#allocation4], %s86
      %s88 = sshll.u32 [#allocation5], 4
      %s89 = int_to_ptr.vmem [resolvable:$true] %s88
      %94 = dma.vmem_to_hbm [thread:$0]  %s89, 256, %s3, [#allocation4], 128, 128, 8
    $region21: #{layernorm.1} parent=1 // pred_fallthru
      _
    // Predicated region
    $region22: #{layernorm.1} parent=1 // pred_check
      _
    $region23: #{layernorm.1} parent=1 // pred_check_branch
      %96 = sbr.rel (0) target = $region25
    $region24: #{layernorm.1} parent=1 // pred_region
      %97 = dma.done [#allocation4], 256
    $region25: #{layernorm.1} parent=1 // pred_fallthru
      _
    %98 = vsyncpa [#allocation3], 1
    %99 = vsyncpa [#allocation4], 1

</llo_original>
